<compile_context>
chip_gen: v6e
topology: v6e:2x2x1
jax: 0.10.0
libtpu: 0.0.40
codegen_flags: <defaults>
</compile_context>

<pallas_src>
import functools

import jax
import jax.numpy as jnp
from jax.experimental import pallas as pl
from jax.experimental.pallas import tpu as pltpu


# ----------------------- hardware-aware sizing --------------------------------
@functools.lru_cache(maxsize=1)
def _hw_info():
    """(vmem_capacity_bytes, vmem_limit_bytes, dual_core) with safe fallbacks."""
    vmem_cap = 64 << 20                      # conservative fallback (v7x-sized)
    try:
        vmem_cap = int(pltpu.get_tpu_info().vmem_capacity_bytes)
    except Exception:
        pass
    dual_core = False
    try:
        kind = jax.devices()[0].device_kind.lower()
        dual_core = ("v7" in kind) or ("7x" in kind)
    except Exception:
        pass
    # ~3/4 of physical VMEM: 96 MiB on v5e/v6e (128 MiB), 48 MiB on v7x (64 MiB).
    vmem_limit = max(32 << 20, min(vmem_cap * 3 // 4, 96 << 20))
    return vmem_cap, vmem_limit, dual_core


# ----------------------- small in-kernel helpers ------------------------------
def _fold_lane_groups(v, k, c):
    """Sum the k lane-groups (width c) of a (1, k*c) row; result replicated per
    group.  k is a power of two -> log2(k) XLU rolls (tree fold)."""
    step = c
    while step < k * c:
        v = v + pltpu.roll(v, shift=step, axis=1)
        step *= 2
    return v


def _colsum(x):
    """Column sum of (R, C): VALU-accumulate over (R//8, 8, C) sub-blocks when
    possible, collapsing 8->1 sublanes (XLU) only once at the end."""
    r, c = x.shape
    if r >= 16 and r % 8 == 0:
        x = jnp.sum(x.reshape(r // 8, 8, c), axis=0)
    return jnp.sum(x, axis=0, keepdims=True)


# ----------------------- Fused single-pass kernel (small tensors) -------------
def _fused_kernel(x_ref, gamma_ref, beta_ref, o_ref, *, k, c, n_rows, eps):
    n = jnp.float32(n_rows)
    mean = _fold_lane_groups(_colsum(x_ref[...].astype(jnp.float32)), k, c) / n
    xc = x_ref[...].astype(jnp.float32) - mean
    var = _fold_lane_groups(_colsum(xc * xc), k, c) / n      # stable E[(x-mean)^2]
    scale = gamma_ref[...] * jax.lax.rsqrt(var + jnp.float32(eps))
    # Write the output from a fresh read of x_ref instead of keeping xc live
    # through the store: smaller peak f32 working set -> larger fusible size.
    o_ref[...] = ((x_ref[...].astype(jnp.float32) - mean) * scale
                  + beta_ref[...]).astype(o_ref.dtype)


# ----------------------- Pass 1: shifted per-channel sums ---------------------
def _stats_kernel(x_ref, off_ref, sum_ref, sq_ref, *,
                  tile_rows, tiles_per_slab, valid_rows, mask_needed):
    i = pl.program_id(1)

    @pl.when(i == 0)
    def _():
        sum_ref[...] = jnp.zeros_like(sum_ref)
        sq_ref[...] = jnp.zeros_like(sq_ref)

    # Shifted moments: accumulate (x - off) and (x - off)^2 to avoid the
    # E[x^2] - mean^2 cancellation flagged in review.
    x = x_ref[...].astype(jnp.float32) - off_ref[...]         # (tile_rows, Cp)
    if mask_needed:
        gtile = pl.program_id(0) * tiles_per_slab + i
        row = gtile * tile_rows + jax.lax.broadcasted_iota(jnp.int32, x.shape, 0)
        x = jnp.where(row < valid_rows, x, 0.0)
    # Keep the hot reduction on the VALU: accumulate into an (8, Cp) block; the
    # final 8->1 sublane collapse happens once, inside pass 2.
    xr = x.reshape(tile_rows // 8, 8, x.shape[-1])
    sum_ref[...] += jnp.sum(xr, axis=0)
    sq_ref[...] += jnp.sum(xr * xr, axis=0)


# ----------------------- Pass 2: normalize (sums consumed in-kernel) ----------
def _norm_kernel(x_ref, sum_ref, sq_ref, off_ref, gamma_ref, beta_ref, o_ref, *,
                 k, c, n_rows, eps):
    # Per-step scale/shift recompute from the raw partial sums: a few vregs of
    # XLU/EUP work, entirely hidden under the mem-bound tile DMA.  This removes
    # the old inter-pass XLA glue ops and the dispatch gap between calls.
    n = jnp.float32(n_rows)
    s = _fold_lane_groups(jnp.sum(sum_ref[...], axis=0, keepdims=True), k, c)
    q = _fold_lane_groups(jnp.sum(sq_ref[...], axis=0, keepdims=True), k, c)
    mean_rel = s / n                                   # mean of (x - off)
    var = jnp.maximum(q / n - mean_rel * mean_rel, 0.0)   # shift-invariant, biased
    scale = gamma_ref[...] * jax.lax.rsqrt(var + jnp.float32(eps))
    shift = beta_ref[...] - (mean_rel + off_ref[...]) * scale
    o_ref[...] = (x_ref[...].astype(jnp.float32) * scale + shift).astype(o_ref.dtype)


# ----------------------- Wrapper ----------------------------------------------
@functools.partial(jax.jit, static_argnames=("eps", "tile_rows", "max_fused_bytes"))
def batch_norm_sequence(x, gamma, beta, *, eps=1e-5, tile_rows=None,
                        max_fused_bytes=None):
    """x: (B, T, C). Returns training-mode batch-normalized x (same shape/dtype)."""
    B, T, C = x.shape
    rows = B * T
    vmem_cap, vmem_limit, dual_core = _hw_info()

    # Lane-dense packing (pure metadata reshape).  If rows % (128//C) != 0, fall
    # back to the largest power-of-two k dividing rows instead of straight to 1.
    # TODO(synk): mask/pad up to k-1 tail rows to keep full k for odd row counts.
    k = 1
    if C < 128 and 128 % C == 0:
        k = 128 // C
        while k > 1 and rows % k != 0:
            k //= 2
    Cp = k * C
    rows_p = rows // k
    xp = x.reshape(rows_p, Cp)

    gamma_t = jnp.tile(gamma.astype(jnp.float32).reshape(C), k).reshape(1, Cp)
    beta_t = jnp.tile(beta.astype(jnp.float32).reshape(C), k).reshape(1, Cp)

    isz = x.dtype.itemsize
    f32_bytes = rows_p * Cp * 4

    if max_fused_bytes is None:
        if dual_core:
            # Fused path is grid=(1,) -> single TensorCore.  The two-pass path
            # uses both v7x cores, so only fuse where dispatch overhead wins.
            max_fused_bytes = 4 << 20
        else:
            # Fused working set ~= 2*(in+out blocks in x dtype) + ~1.5 f32 temps.
            per_f32_byte = 4.0 * (isz / 4.0) + 1.5
            max_fused_bytes = int(vmem_limit * 0.85 / per_f32_byte)
    use_fused = (f32_bytes <= max_fused_bytes) or rows_p < 8

    if use_fused:
        # ---------------- fused single-pass path ----------------
        yp = pl.pallas_call(
            functools.partial(_fused_kernel, k=k, c=C, n_rows=rows, eps=eps),
            out_shape=jax.ShapeDtypeStruct((rows_p, Cp), x.dtype),
            grid_spec=pltpu.PrefetchScalarGridSpec(
                num_scalar_prefetch=0,
                grid=(1,),
                in_specs=[
                    pl.BlockSpec((rows_p, Cp), lambda i: (0, 0)),
                    pl.BlockSpec((1, Cp), lambda i: (0, 0)),
                    pl.BlockSpec((1, Cp), lambda i: (0, 0)),
                ],
                out_specs=pl.BlockSpec((rows_p, Cp), lambda i: (0, 0)),
            ),
            compiler_params=pltpu.CompilerParams(
                dimension_semantics=("arbitrary",),
                vmem_limit_bytes=vmem_limit),
            cost_estimate=pl.CostEstimate(
                flops=7 * rows_p * Cp, transcendentals=Cp,
                bytes_accessed=2 * rows_p * Cp * isz),
        )(xp, gamma_t, beta_t)
        return yp.reshape(B, T, C)

    # ---------------- two-pass path (large tensors) ----------------
    if tile_rows is None:
        cap = 16384 if vmem_cap >= (100 << 20) else 8192
        budget = int(vmem_limit * 0.7) // max(1, 4 * Cp * isz)
        tile_rows = max(512, min(cap, budget))
    tr = max(8, (int(tile_rows) // 8) * 8)
    tr = min(tr, max(8, (rows_p // 8) * 8))            # never exceed the array

    total_tiles = pl.cdiv(rows_p, tr)
    # Leading "parallel" slab axis so both v7x TensorCores run pass 1; on
    # single-core chips (n_slabs=1) it is a no-op.
    n_slabs = 2 if (dual_core and total_tiles >= 2) else 1
    tiles_per_slab = pl.cdiv(total_tiles, n_slabs)
    mask_needed = (n_slabs * tiles_per_slab * tr) != rows_p

    # Per-channel shift (first row) for numerically-robust shifted moments.
    off_t = jnp.tile(x.reshape(rows, C)[0].astype(jnp.float32), k).reshape(1, Cp)

    def x_stats_map(s, i):
        # Clamp so a slab's trailing (duplicate) block never indexes OOB; the
        # in-kernel global-row mask zeroes its contribution.
        return (jnp.minimum(s * tiles_per_slab + i, total_tiles - 1), 0)

    sums, sqs = pl.pallas_call(
        functools.partial(_stats_kernel, tile_rows=tr,
                          tiles_per_slab=tiles_per_slab,
                          valid_rows=rows_p, mask_needed=mask_needed),
        out_shape=(jax.ShapeDtypeStruct((n_slabs * 8, Cp), jnp.float32),
                   jax.ShapeDtypeStruct((n_slabs * 8, Cp), jnp.float32)),
        grid_spec=pltpu.PrefetchScalarGridSpec(
            num_scalar_prefetch=0,
            grid=(n_slabs, tiles_per_slab),
            # NOTE: pipeline_mode=pl.Buffered(3) on the x spec is the next knob
            # if xprof shows exposed DMA on v7x.
            in_specs=[pl.BlockSpec((tr, Cp), x_stats_map),
                      pl.BlockSpec((1, Cp), lambda s, i: (0, 0))],
            out_specs=(pl.BlockSpec((8, Cp), lambda s, i: (s, 0)),
                       pl.BlockSpec((8, Cp), lambda s, i: (s, 0)))),
        compiler_params=pltpu.CompilerParams(
            dimension_semantics=("parallel", "arbitrary"),
            vmem_limit_bytes=vmem_limit),
        cost_estimate=pl.CostEstimate(
            flops=4 * rows_p * Cp, transcendentals=0,
            bytes_accessed=rows_p * Cp * isz),
    )(xp, off_t)

    yp = pl.pallas_call(
        functools.partial(_norm_kernel, k=k, c=C, n_rows=rows, eps=eps),
        out_shape=jax.ShapeDtypeStruct((rows_p, Cp), x.dtype),
        grid_spec=pltpu.PrefetchScalarGridSpec(
            num_scalar_prefetch=0,
            grid=(total_tiles,),
            in_specs=[pl.BlockSpec((tr, Cp), lambda i: (i, 0)),
                      pl.BlockSpec((n_slabs * 8, Cp), lambda i: (0, 0)),
                      pl.BlockSpec((n_slabs * 8, Cp), lambda i: (0, 0)),
                      pl.BlockSpec((1, Cp), lambda i: (0, 0)),
                      pl.BlockSpec((1, Cp), lambda i: (0, 0)),
                      pl.BlockSpec((1, Cp), lambda i: (0, 0))],
            out_specs=pl.BlockSpec((tr, Cp), lambda i: (i, 0))),
        compiler_params=pltpu.CompilerParams(
            dimension_semantics=("parallel",),
            vmem_limit_bytes=vmem_limit),
        cost_estimate=pl.CostEstimate(
            flops=2 * rows_p * Cp, transcendentals=Cp,
            bytes_accessed=2 * rows_p * Cp * isz),
    )(xp, sums, sqs, off_t, gamma_t, beta_t)

    return yp.reshape(B, T, C)


# ----------------------- Reference (plain JAX) --------------------------------
def _reference(x, gamma, beta, eps=1e-5):
    xf = x.astype(jnp.float32)
    mean = jnp.mean(xf, axis=(0, 1), keepdims=True)
    var = jnp.mean((xf - mean) ** 2, axis=(0, 1), keepdims=True)   # biased
    y = (xf - mean) / jnp.sqrt(var + eps) * gamma.reshape(1, 1, -1) + beta.reshape(1, 1, -1)
    return y.astype(x.dtype)


if __name__ == "__main__":
    key = jax.random.PRNGKey(0)
    k1, k2, k3, k4 = jax.random.split(key, 4)

    # 1) small shape -> fused single-pass path (full lane packing, k=4).
    B, T, C = 2, 8, 32
    x = jax.random.normal(k1, (B, T, C), dtype=jnp.float32) * 2.0 + 0.5
    gamma = 1.0 + 0.1 * jnp.arange(C, dtype=jnp.float32) / C
    beta = 0.05 * jnp.arange(C, dtype=jnp.float32)
    y = jax.block_until_ready(batch_norm_sequence(x, gamma, beta))
    assert y.shape == (B, T, C)
    assert jnp.allclose(y, _reference(x, gamma, beta), atol=1e-4, rtol=1e-4), \
        "fused path mismatch"

    # 2) odd row count -> power-of-two packing fallback (k=1), still fused.
    B3, T3, C3 = 3, 7, 32
    x3 = jax.random.normal(k3, (B3, T3, C3), dtype=jnp.float32) - 0.3
    g3 = jnp.linspace(0.8, 1.2, C3, dtype=jnp.float32)
    b3 = jnp.linspace(-0.1, 0.1, C3, dtype=jnp.float32)
    y3 = jax.block_until_ready(batch_norm_sequence(x3, g3, b3))
    assert jnp.allclose(y3, _reference(x3, g3, b3), atol=1e-4, rtol=1e-4), \
        "fallback-k fused path mismatch"

    # 3) force the tiled two-pass path (stats + normalize), divisible tiles.
    B2, T2, C2 = 8, 512, 32
    x2 = jax.random.normal(k2, (B2, T2, C2), dtype=jnp.float32) * 3.0 - 1.0
    g2 = jnp.linspace(0.5, 1.5, C2, dtype=jnp.float32)
    b2 = jnp.linspace(-0.2, 0.2, C2, dtype=jnp.float32)
    y2 = jax.block_until_ready(
        batch_norm_sequence(x2, g2, b2, tile_rows=128, max_fused_bytes=0))
    assert y2.shape == (B2, T2, C2)
    assert jnp.allclose(y2, _reference(x2, g2, b2), atol=1e-3, rtol=1e-3), \
        "two-pass path mismatch"

    # 4) two-pass with ragged tiles + reduced packing (k=2) + nonzero mean
    #    -> exercises row masking and the shifted-moment stats.
    B4, T4, C4 = 2, 125, 32
    x4 = jax.random.normal(k4, (B4, T4, C4), dtype=jnp.float32) * 1.5 + 4.0
    g4 = jnp.linspace(0.9, 1.1, C4, dtype=jnp.float32)
    b4 = jnp.linspace(-0.05, 0.05, C4, dtype=jnp.float32)
    y4 = jax.block_until_ready(
        batch_norm_sequence(x4, g4, b4, tile_rows=64, max_fused_bytes=0))
    assert jnp.allclose(y4, _reference(x4, g4, b4), atol=1e-3, rtol=1e-3), \
        "masked two-pass path mismatch"

    print("KERNEL_OK")
</pallas_src>

<mosaic_0001>
module attributes {stable_mosaic.version = 11 : i64} {
  func.func @_fused_kernel(%arg0: i32, %arg1: memref<4x128xf32, #tpu.memory_space<vmem>>, %arg2: memref<1x128xf32, #tpu.memory_space<vmem>>, %arg3: memref<1x128xf32, #tpu.memory_space<vmem>>, %arg4: memref<4x128xf32, #tpu.memory_space<vmem>>) attributes {dimension_semantics = [#tpu.dimension_semantics<arbitrary>], iteration_bounds = array<i64: 1>, scalar_prefetch = 0 : i64, scratch_operands = 0 : i64, tpu.core_type = #tpu.core_type<tc>, window_params = [{pipeline_mode = #tpu.pipeline_mode<synchronous>, transform_indices = @transform_0, window_bounds = array<i64: 4, 128>}, {pipeline_mode = #tpu.pipeline_mode<synchronous>, transform_indices = @transform_1, window_bounds = array<i64: 1, 128>}, {pipeline_mode = #tpu.pipeline_mode<synchronous>, transform_indices = @transform_2, window_bounds = array<i64: 1, 128>}, {pipeline_mode = #tpu.pipeline_mode<synchronous>, transform_indices = @transform_3, window_bounds = array<i64: 4, 128>}]} {
    %c0 = arith.constant 0 : index
    %c0_0 = arith.constant 0 : index
    %0 = vector.load %arg1[%c0, %c0_0] : memref<4x128xf32, #tpu.memory_space<vmem>>, vector<4x128xf32>
    %cst = arith.constant dense<0.000000e+00> : vector<128xf32>
    %1 = vector.multi_reduction <add>, %0, %cst [0] : vector<4x128xf32> to vector<128xf32>
    %2 = vector.shape_cast %1 : vector<128xf32> to vector<1x128xf32>
    %c32_i32 = arith.constant 32 : i32
    %3 = tpu.dynamic_rotate %2 by %c32_i32 dim 1 : vector<1x128xf32>, i32 -> vector<1x128xf32>
    %4 = arith.addf %2, %3 : vector<1x128xf32>
    %c64_i32 = arith.constant 64 : i32
    %5 = tpu.dynamic_rotate %4 by %c64_i32 dim 1 : vector<1x128xf32>, i32 -> vector<1x128xf32>
    %6 = arith.addf %4, %5 : vector<1x128xf32>
    %cst_1 = arith.constant 1.600000e+01 : f32
    %7 = vector.broadcast %cst_1 : f32 to vector<1x128xf32>
    %8 = arith.divf %6, %7 : vector<1x128xf32>
    %c0_2 = arith.constant 0 : index
    %c0_3 = arith.constant 0 : index
    %9 = vector.load %arg1[%c0_2, %c0_3] : memref<4x128xf32, #tpu.memory_space<vmem>>, vector<4x128xf32>
    %10 = vector.broadcast %8 : vector<1x128xf32> to vector<4x128xf32>
    %11 = arith.subf %9, %10 : vector<4x128xf32>
    %12 = arith.mulf %11, %11 : vector<4x128xf32>
    %cst_4 = arith.constant dense<0.000000e+00> : vector<128xf32>
    %13 = vector.multi_reduction <add>, %12, %cst_4 [0] : vector<4x128xf32> to vector<128xf32>
    %14 = vector.shape_cast %13 : vector<128xf32> to vector<1x128xf32>
    %c32_i32_5 = arith.constant 32 : i32
    %15 = tpu.dynamic_rotate %14 by %c32_i32_5 dim 1 : vector<1x128xf32>, i32 -> vector<1x128xf32>
    %16 = arith.addf %14, %15 : vector<1x128xf32>
    %c64_i32_6 = arith.constant 64 : i32
    %17 = tpu.dynamic_rotate %16 by %c64_i32_6 dim 1 : vector<1x128xf32>, i32 -> vector<1x128xf32>
    %18 = arith.addf %16, %17 : vector<1x128xf32>
    %cst_7 = arith.constant 1.600000e+01 : f32
    %19 = vector.broadcast %cst_7 : f32 to vector<1x128xf32>
    %20 = arith.divf %18, %19 : vector<1x128xf32>
    %c0_8 = arith.constant 0 : index
    %c0_9 = arith.constant 0 : index
    %21 = vector.load %arg2[%c0_8, %c0_9] : memref<1x128xf32, #tpu.memory_space<vmem>>, vector<1x128xf32>
    %cst_10 = arith.constant 9.99999974E-6 : f32
    %22 = vector.broadcast %cst_10 : f32 to vector<1x128xf32>
    %23 = arith.addf %20, %22 : vector<1x128xf32>
    %24 = math.rsqrt %23 : vector<1x128xf32>
    %25 = arith.mulf %21, %24 : vector<1x128xf32>
    %c0_11 = arith.constant 0 : index
    %c0_12 = arith.constant 0 : index
    %26 = vector.load %arg1[%c0_11, %c0_12] : memref<4x128xf32, #tpu.memory_space<vmem>>, vector<4x128xf32>
    %27 = vector.broadcast %8 : vector<1x128xf32> to vector<4x128xf32>
    %28 = arith.subf %26, %27 : vector<4x128xf32>
    %29 = vector.broadcast %25 : vector<1x128xf32> to vector<4x128xf32>
    %30 = arith.mulf %28, %29 : vector<4x128xf32>
    %c0_13 = arith.constant 0 : index
    %c0_14 = arith.constant 0 : index
    %31 = vector.load %arg3[%c0_13, %c0_14] : memref<1x128xf32, #tpu.memory_space<vmem>>, vector<1x128xf32>
    %32 = vector.broadcast %31 : vector<1x128xf32> to vector<4x128xf32>
    %33 = arith.addf %30, %32 : vector<4x128xf32>
    %c0_15 = arith.constant 0 : index
    %c0_16 = arith.constant 0 : index
    %34 = vector.load %arg4[%c0_15, %c0_16] : memref<4x128xf32, #tpu.memory_space<vmem>>, vector<4x128xf32>
    tpu.vector_store %arg4[%c0_15, %c0_16], %33 {strides = array<i32>} : memref<4x128xf32, #tpu.memory_space<vmem>>, vector<4x128xf32>,
    return
  }
  func.func @transform_0(%arg0: i32) -> (i32, i32) {
    %c0_i32 = arith.constant 0 : i32
    %c0_i32_0 = arith.constant 0 : i32
    %c0_i32_1 = arith.constant 0 : i32
    return %c0_i32, %c0_i32_0 : i32, i32
  }
  func.func @transform_1(%arg0: i32) -> (i32, i32) {
    %c0_i32 = arith.constant 0 : i32
    %c0_i32_0 = arith.constant 0 : i32
    %c0_i32_1 = arith.constant 0 : i32
    return %c0_i32, %c0_i32_0 : i32, i32
  }
  func.func @transform_2(%arg0: i32) -> (i32, i32) {
    %c0_i32 = arith.constant 0 : i32
    %c0_i32_0 = arith.constant 0 : i32
    %c0_i32_1 = arith.constant 0 : i32
    return %c0_i32, %c0_i32_0 : i32, i32
  }
  func.func @transform_3(%arg0: i32) -> (i32, i32) {
    %c0_i32 = arith.constant 0 : i32
    %c0_i32_0 = arith.constant 0 : i32
    %c0_i32_1 = arith.constant 0 : i32
    return %c0_i32, %c0_i32_0 : i32, i32
  }
}

</mosaic_0001>

<llo_original>
// kernel: tile.14
$region0: #{tile.14}
  %s0 = inlined_call_operand.vmem [shape: f32[4,32], index: 0, kind: input, shape index: {}]
  %s1 = inlined_call_operand.vmem [shape: f32[1,128], index: 1, kind: output, shape index: {}]
  $region1: #{tile.14} parent=0
    #allocation0 [shape = 'u8[4096]{0}', space=vmem, size = 0x1000, scoped, tag = 'scoped mem for output reshape']
    #allocation1 [shape = 'u8[4096]{0}', space=vmem, size = 0x1000, scoped, tag = 'scoped mem for input reshape']
    %s3 = sshll.u32 1, 4
    %s4 = ssub.s32 %s3, 1
    %v5 = vld [vmem:[%s0] sm:%s4]
    %6 = vst [vmem:[#allocation1] sm:%s4] %v5
    %v7 = vld [vmem:[#allocation1] sm:$0x1]
    %vm8 = vcmask 261120
    %9 = vst.msk [vmem:[#allocation0] sm:$0x1] %vm8, %v7
    %s10 = scalar_lea.vmem [#allocation1], 3
    %v11 = vld [vmem:[%s10] sm:$0x1]
    %12 = vrot.lane.b32.xlu0 %v11, 96
    %v13 = vpop.permute.xlu0 %12
    %vm14 = vcmask 1048320
    %15 = vst.msk [vmem:[#allocation0] sm:$0x1] %vm14, %v13
    %s16 = scalar_lea.vmem [#allocation1], 2
    %v17 = vld [vmem:[%s16] sm:$0x1]
    %18 = vrot.lane.b32.xlu0 %v17, 64
    %v19 = vpop.permute.xlu0 %18
    %vm20 = vcmask 785920
    %21 = vst.msk [vmem:[#allocation0] sm:$0x1] %vm20, %v19
    %s22 = scalar_lea.vmem [#allocation1], 1
    %v23 = vld [vmem:[%s22] sm:$0x1]
    %24 = vrot.lane.b32.xlu0 %v23, 32
    %v25 = vpop.permute.xlu0 %24
    %vm26 = vcmask 523520
    %27 = vst.msk [vmem:[#allocation0] sm:$0x1] %vm26, %v25
    %s29 = sshll.u32 1, 1
    %s30 = ssub.s32 %s29, 1
    %v32 = vld [vmem:[#allocation0] sm:%s30]
    %s33 = sshll.u32 1, 1
    %s34 = ssub.s32 %s33, 1
    %35 = vst [vmem:[%s1] sm:%s34] %v32

// kernel: tile.13
$region0: #{tile.13}
  #allocation0 [shape = 's32[1]{0}', space=sflag, size = 0x4, scoped, tag = 'scoped memory for tile.13']
  %s0 = inlined_call_operand.vmem [shape: f32[32], index: 0, kind: input, shape index: {}]
  %s1 = inlined_call_operand.vmem [shape: f32[4,32], index: 1, kind: output, shape index: {}]
  // Predicated region
  $region2: #{tile.13} parent=0 // pred_check
    _
  $region3: #{tile.13} parent=0 // pred_check_branch
    %3 = sbr.rel (0) target = $region5
  $region4: #{tile.13} parent=0 // pred_region
    _
  $region5: #{tile.13} parent=0 // pred_fallthru
    _
  %v4 = vld [vmem:[%s0] ss:$0 sm:$0xff]
  %5 = vst [vmem:[%s1] sm:$0xf] %v4

// kernel: batch_norm_sequence.1
$region0: #{batch_norm_sequence.1}
  #allocation0 [shape = 'u32[]', space=smem, size = 0x4, offset = 0x4, fixed_abs, tag = 'smem constant byte address 0x4 - core index']
  #allocation1 [shape = 'u32[144,128]{1,0:T(1,128)}', space=vmem, size = 0x12000, scoped, tag = 'internal scratch']
  %s0 = inlined_call_operand.vmem [shape: f32[4,128], index: 0, kind: input, shape index: {}]
  %s1 = inlined_call_operand.vmem [shape: f32[1,128], index: 1, kind: input, shape index: {}]
  %s2 = inlined_call_operand.vmem [shape: f32[1,128], index: 2, kind: input, shape index: {}]
  %s3 = inlined_call_operand.vmem [shape: f32[4,128], index: 3, kind: output, shape index: {}]
  %s4 = sld [smem:[#allocation0]]
  $region22: #{batch_norm_sequence.1} parent=0
    _
  %s6 = ssub.s32 1, %s4
  %s7 = scalar_select 0, %s6, %s4
  // Predicated region
  $region2: #{batch_norm_sequence.1} parent=0 // pred_check
    _
  $region3: #{batch_norm_sequence.1} parent=0 // pred_check_branch
    %9 = sbr.rel (0) target = $region5
  $region4: #{batch_norm_sequence.1} parent=0 // pred_region
    _
  $region5: #{batch_norm_sequence.1} parent=0 // pred_fallthru
    _
  // Predicated region
  $region6: #{batch_norm_sequence.1} parent=0 // pred_check
    _
  $region7: #{batch_norm_sequence.1} parent=0 // pred_check_branch
    %11 = sbr.rel (0) target = $region9
  $region8: #{batch_norm_sequence.1} parent=0 // pred_region
    _
  $region9: #{batch_norm_sequence.1} parent=0 // pred_fallthru
    _
  // Predicated region
  $region10: #{batch_norm_sequence.1} parent=0 // pred_check
    _
  $region11: #{batch_norm_sequence.1} parent=0 // pred_check_branch
    %13 = sbr.rel (0) target = $region13
  $region12: #{batch_norm_sequence.1} parent=0 // pred_region
    _
  $region13: #{batch_norm_sequence.1} parent=0 // pred_fallthru
    _
  %v14 = vld [vmem:[%s0] sm:$0xf]
  %vm15 = vcmask 1043456
  %v16 = vsel %vm15, %v14, 0.0
  %v17 = vrot.slane %v16, 4
  %v18 = vadd.f32 %v16, %v17
  %v19 = vrot.slane %v18, 2
  %v20 = vadd.f32 %v18, %v19
  %v21 = vrot.slane %v20, 1
  %v22 = vadd.f32 %v20, %v21
  %23 = vrot.lane.b32.xlu0 %v22, 32
  %v24 = vpop.permute.xlu0 %23
  %v25 = vadd.f32 %v22, %v24
  %26 = vrot.lane.b32.xlu0 %v25, 64
  %v27 = vpop.permute.xlu0 %26
  %v28 = vadd.f32 %v25, %v27
  %v29 = vrcp.pop 16.0
  %v30 = vmul.f32 %v28, %v29
  %v31 = vlaneseq
  %v32 = vshrl.u32 %v31, 7
  %v33 = vsub.s32 0, %v32
  %v34 = vrot.slane %v30, %v33
  %v35 = vsub.f32 %v14, %v34
  %v36 = vmul.f32 %v35, %v35
  %v37 = vsel %vm15, %v36, 0.0
  %v38 = vrot.slane %v37, 4
  %v39 = vadd.f32 %v37, %v38
  %v40 = vrot.slane %v39, 2
  %v41 = vadd.f32 %v39, %v40
  %v42 = vrot.slane %v41, 1
  %v43 = vadd.f32 %v41, %v42
  %44 = vrot.lane.b32.xlu0 %v43, 32
  %v45 = vpop.permute.xlu0 %44
  %v46 = vadd.f32 %v43, %v45
  %47 = vrot.lane.b32.xlu0 %v46, 64
  %v48 = vpop.permute.xlu0 %47
  %v49 = vadd.f32 %v46, %v48
  %v50 = vmul.f32 %v49, %v29
  %v51 = vld [vmem:[%s1] sm:$0x1]
  %v52 = vadd.f32 %v50, 1e-05
  %v53 = vrsqrt.pop %v52
  %v54 = vmul.f32 %v51, %v53
  %v56 = vlaneseq
  %v57 = vshrl.u32 %v56, 7
  %v58 = vsub.s32 0, %v57
  %v59 = vrot.slane %v54, %v58
  %v61 = vmul.f32 %v35, %v59
  %v62 = vld [vmem:[%s2] sm:$0x1]
  %v64 = vlaneseq
  %v65 = vshrl.u32 %v64, 7
  %v66 = vsub.s32 0, %v65
  %v67 = vrot.slane %v62, %v66
  %v69 = vadd.f32 %v61, %v67
  %70 = vst [vmem:[%s3] sm:$0xf] %v69
  // Predicated region
  $region14: #{batch_norm_sequence.1} parent=0 // pred_check
    _
  $region15: #{batch_norm_sequence.1} parent=0 // pred_check_branch
    %72 = sbr.rel (0) target = $region17
  $region16: #{batch_norm_sequence.1} parent=0 // pred_region
    _
  $region17: #{batch_norm_sequence.1} parent=0 // pred_fallthru
    _
  // Predicated region
  $region18: #{batch_norm_sequence.1} parent=0 // pred_check
    _
  $region19: #{batch_norm_sequence.1} parent=0 // pred_check_branch
    %74 = sbr.rel (0) target = $region21
  $region20: #{batch_norm_sequence.1} parent=0 // pred_region
    _
  $region21: #{batch_norm_sequence.1} parent=0 // pred_fallthru
    _

</llo_original>
